<compile_context>
chip_gen: v5e
topology: v5e:2x2
jax: 0.10.0
libtpu: 0.0.40
codegen_flags: <defaults>
</compile_context>

<pallas_src>
import functools

import jax
import jax.numpy as jnp
from jax import lax
from jax.experimental import pallas as pl
from jax.experimental.pallas import tpu as pltpu

EPS = 1e-5
NEG_SLOPE = 0.2
_LANE = 128


def _tconv_in_lrelu_kernel(x_ref, w_ref, o_ref, *, hw, tc, masked):
    # x_ref: (1, Cin, HWp) mm-dtype ; w_ref: (4*tc, Cin) mm-dtype ; o_ref: (1, 4*tc, HWp)
    # rows of w_ref / o_ref are k-major within the Cout tile: row = k*tc + c, k = kh*2+kw
    x = x_ref[0]                       # (Cin, HWp)
    w = w_ref[...]                     # (4*tc, Cin)

    # Single MXU pass covering all four kernel offsets of this Cout tile (f32 accum).
    y = jnp.dot(w, x, preferred_element_type=jnp.float32)        # (4*tc, HWp) f32

    # --- InstanceNorm mean by linearity: mean_c = (sum_k W_k) @ (sum_p x) / (4*HW).
    # Cheap (Cin x HW reduction + tiny dot) and available *before* touching y, so the
    # variance below is a true centered (two-pass quality) variance in a single pass.
    xf = x.astype(jnp.float32)
    sum_x = jnp.sum(xf, axis=1, keepdims=True)                    # (Cin, 1) f32
    wf = w.astype(jnp.float32)
    wk = wf[0:tc] + wf[tc:2 * tc] + wf[2 * tc:3 * tc] + wf[3 * tc:4 * tc]  # (tc, Cin)
    inv_n = 1.0 / (4.0 * hw)
    mean = jnp.dot(wk, sum_x, preferred_element_type=jnp.float32) * inv_n  # (tc, 1)
    mean_full = jnp.concatenate([mean, mean, mean, mean], axis=0)          # (4*tc, 1)

    # --- centered activations (needed for the output anyway) + biased variance
    yc = y - mean_full                                            # (4*tc, HWp)
    if masked:
        lane = lax.broadcasted_iota(jnp.int32, yc.shape, 1)
        yc_sq = jnp.where(lane < hw, yc, 0.0)                     # exclude padded lanes
    else:
        yc_sq = yc
    row_sq = jnp.sum(yc_sq * yc_sq, axis=1, keepdims=True)        # (4*tc, 1)
    sq = (row_sq[0:tc] + row_sq[tc:2 * tc]
          + row_sq[2 * tc:3 * tc] + row_sq[3 * tc:4 * tc])        # (tc, 1)
    inv = lax.rsqrt(sq * inv_n + EPS)                             # (tc, 1)
    inv_full = jnp.concatenate([inv, inv, inv, inv], axis=0)      # (4*tc, 1)

    # normalize + LeakyReLU(0.2), lane-dense full-block store
    z = yc * inv_full
    o_ref[0] = jnp.maximum(z, NEG_SLOPE * z).astype(o_ref.dtype)


def _vmem_capacity_bytes():
    try:
        cap = getattr(pltpu.get_tpu_info(), "vmem_capacity_bytes", None)
        if cap:
            return int(cap)
    except Exception:
        pass
    return 64 << 20  # conservative fallback: v7x per-TensorCore VMEM


def _pick_cout_tile(cout, cin, hw_pad, mm_item, out_item, budget):
    """Largest Cout tile (divisor of cout, weight-block sublane aligned) fitting budget."""
    fixed = (2 * cin * hw_pad * mm_item      # double-buffered input block
             + cin * hw_pad * 4              # f32 upcast of x for the mean reduction
             + (1 << 20))                    # misc headroom
    def per_tile(tc):
        return (2 * 4 * tc * cin * mm_item          # double-buffered weight block
                + 2 * 4 * tc * hw_pad * out_item    # double-buffered output block
                + 3 * 4 * tc * hw_pad * 4)          # y + centered/normalized f32 temps
    cands = [t for t in range(cout, 0, -1)
             if cout % t == 0 and (t == cout or (4 * t) % 8 == 0)]
    tc = cands[-1]
    for t in cands:
        if fixed + per_tile(t) <= budget:
            tc = t
            break
    return tc, fixed + per_tile(tc)


def transpose_conv_block(x_nchw, weight, *,
                         matmul_dtype=jnp.bfloat16, out_dtype=jnp.float32):
    """x_nchw: (N, Cin, H, W) f32; weight: (Cin, Cout, 2, 2) f32 (PyTorch ConvTranspose2d
    layout). Returns (N, Cout, 2H, 2W) in out_dtype (f32 default, matching the module).

    matmul_dtype=jnp.bfloat16 (default) feeds the MXU at native rate and halves input
    DMA; accumulation and all InstanceNorm / LeakyReLU math stay f32. Use
    matmul_dtype=jnp.float32 for bit-faithful f32 semantics.
    """
    n, cin, h, w = x_nchw.shape
    cout = weight.shape[1]
    hw = h * w
    hw_pad = ((hw + _LANE - 1) // _LANE) * _LANE

    mm_item = jnp.dtype(matmul_dtype).itemsize
    out_item = jnp.dtype(out_dtype).itemsize

    # generation-aware VMEM budget (64 MiB on v7x, 128 MiB on v5e/v6e) incl. the f32 y
    cap = _vmem_capacity_bytes()
    budget = max(cap - (8 << 20), 16 << 20)
    tc, est = _pick_cout_tile(cout, cin, hw_pad, mm_item, out_item, budget)
    num_ct = cout // tc
    vmem_limit = int(min(budget, max(est + (8 << 20), 32 << 20)))

    # --- glue: spatial-in-lanes input (pure reshape of NCHW), lane-padded to 128 ---
    x_flat = x_nchw.reshape(n, cin, hw).astype(matmul_dtype)
    if hw_pad != hw:
        x_flat = jnp.pad(x_flat, ((0, 0), (0, 0), (0, hw_pad - hw)))

    # --- glue: weight rows grouped (cout-tile j, k, c_local), k = kh*2 + kw ---
    w_t = jnp.transpose(weight, (1, 2, 3, 0))                  # (Cout, kh, kw, Cin)
    w_t = w_t.reshape(num_ct, tc, 4, cin)
    w_t = jnp.transpose(w_t, (0, 2, 1, 3)).reshape(num_ct * 4 * tc, cin)
    w_t = w_t.astype(matmul_dtype)

    kernel = functools.partial(_tconv_in_lrelu_kernel,
                               hw=hw, tc=tc, masked=(hw_pad != hw))

    y = pl.pallas_call(
        kernel,
        out_shape=jax.ShapeDtypeStruct((n, 4 * cout, hw_pad), out_dtype),
        grid_spec=pltpu.PrefetchScalarGridSpec(
            num_scalar_prefetch=0,
            grid=(n, num_ct),
            in_specs=[
                pl.BlockSpec((1, cin, hw_pad), lambda i, j: (i, 0, 0)),
                pl.BlockSpec((4 * tc, cin), lambda i, j: (j, 0)),
            ],
            out_specs=pl.BlockSpec((1, 4 * tc, hw_pad), lambda i, j: (i, j, 0)),
        ),
        compiler_params=pltpu.CompilerParams(
            dimension_semantics=("parallel", "parallel"),
            vmem_limit_bytes=vmem_limit),
    )(x_flat, w_t)

    # --- glue: strip lane padding, un-interleave (j, kh, kw, c) back to upsampled NCHW.
    # (A consumer that accepts the k-major layout can use `y` directly and skip this.)
    if hw_pad != hw:
        y = y[:, :, :hw]
    y = y.reshape(n, num_ct, 2, 2, tc, h, w)          # (N, j, kh, kw, c, H, W)
    y = jnp.transpose(y, (0, 1, 4, 5, 2, 6, 3))       # (N, j, c, H, kh, W, kw)
    return y.reshape(n, cout, 2 * h, 2 * w)


def _reference(x_nchw, weight):
    """Pure-JAX reference of the PyTorch forward (for verification)."""
    n, cin, h, w = x_nchw.shape
    cout = weight.shape[1]
    out = jnp.zeros((n, cout, 2 * h, 2 * w), jnp.float32)
    for kh in range(2):
        for kw in range(2):
            contrib = jnp.einsum("nihw,io->nohw", x_nchw, weight[:, :, kh, kw])
            out = out.at[:, :, kh::2, kw::2].set(contrib)
    mean = jnp.mean(out, axis=(2, 3), keepdims=True)
    var = jnp.mean((out - mean) ** 2, axis=(2, 3), keepdims=True)
    z = (out - mean) / jnp.sqrt(var + EPS)
    return jnp.where(z >= 0, z, NEG_SLOPE * z)


if __name__ == "__main__":
    key = jax.random.PRNGKey(0)
    kx, kw_key = jax.random.split(key)

    N, IN_CHANS, OUT_CHANS, H, W = 2, 4, 8, 16, 16

    x = jax.random.normal(kx, (N, IN_CHANS, H, W), dtype=jnp.float32)
    # deterministic init mimicking PyTorch's default uniform bound
    bound = float(1.0 / (IN_CHANS * 2 * 2) ** 0.5)
    weight = jax.random.uniform(
        kw_key, (IN_CHANS, OUT_CHANS, 2, 2), dtype=jnp.float32,
        minval=-bound, maxval=bound)

    ref = _reference(x, weight)

    # exact-f32 mode: matches the PyTorch forward semantics to tight tolerance
    out_f32 = jax.block_until_ready(
        transpose_conv_block(x, weight, matmul_dtype=jnp.float32))
    assert out_f32.shape == (N, OUT_CHANS, 2 * H, 2 * W)
    assert jnp.allclose(out_f32, ref, atol=1e-4, rtol=1e-4)

    # default fast path: bf16 MXU inputs, f32 accumulation / stats / output
    out_bf16 = jax.block_until_ready(transpose_conv_block(x, weight))
    assert out_bf16.shape == (N, OUT_CHANS, 2 * H, 2 * W)
    assert jnp.allclose(out_bf16, ref, atol=5e-2, rtol=5e-2)

    # lane-padding path (H*W not a multiple of 128) exercises the masked-variance branch
    H2, W2 = 12, 12
    x2 = jax.random.normal(kx, (N, IN_CHANS, H2, W2), dtype=jnp.float32)
    out2 = jax.block_until_ready(
        transpose_conv_block(x2, weight, matmul_dtype=jnp.float32))
    ref2 = _reference(x2, weight)
    assert out2.shape == (N, OUT_CHANS, 2 * H2, 2 * W2)
    assert jnp.allclose(out2, ref2, atol=1e-4, rtol=1e-4)

    print("KERNEL_OK")
</pallas_src>

<mosaic_0001>
module attributes {stable_mosaic.version = 11 : i64} {
  func.func @_tconv_in_lrelu_kernel(%arg0: i32, %arg1: i32, %arg2: memref<1x4x256xf32, #tpu.memory_space<vmem>>, %arg3: memref<32x4xf32, #tpu.memory_space<vmem>>, %arg4: memref<1x32x256xf32, #tpu.memory_space<vmem>>) attributes {dimension_semantics = [#tpu.dimension_semantics<parallel>, #tpu.dimension_semantics<parallel>], iteration_bounds = array<i64: 2, 1>, scalar_prefetch = 0 : i64, scratch_operands = 0 : i64, tpu.core_type = #tpu.core_type<tc>, window_params = [{transform_indices = @transform_0, window_bounds = array<i64: 1, 4, 256>}, {transform_indices = @transform_1, window_bounds = array<i64: 32, 4>}, {transform_indices = @transform_2, window_bounds = array<i64: 1, 32, 256>}]} {
    %c0 = arith.constant 0 : index
    %c0_0 = arith.constant 0 : index
    %c0_1 = arith.constant 0 : index
    %0 = vector.load %arg2[%c0, %c0_0, %c0_1] : memref<1x4x256xf32, #tpu.memory_space<vmem>>, vector<1x4x256xf32>
    %1 = vector.shape_cast %0 : vector<1x4x256xf32> to vector<4x256xf32>
    %c0_2 = arith.constant 0 : index
    %c0_3 = arith.constant 0 : index
    %2 = vector.load %arg3[%c0_2, %c0_3] : memref<32x4xf32, #tpu.memory_space<vmem>>, vector<32x4xf32>
    %cst = arith.constant dense<0.000000e+00> : vector<32x256xf32>
    %3 = tpu.matmul %2, %1, %cst {dimension_numbers = #tpu.dot_dimension_numbers<[1], [0], [0], [1], [0, 0, 1, 1], [], []>} : vector<32x4xf32>, vector<4x256xf32>, vector<32x256xf32> -> vector<32x256xf32>
    %cst_4 = arith.constant dense<0.000000e+00> : vector<4xf32>
    %4 = vector.multi_reduction <add>, %1, %cst_4 [1] : vector<4x256xf32> to vector<4xf32>
    %5 = vector.shape_cast %4 : vector<4xf32> to vector<4x1xf32>
    %6 = vector.extract_strided_slice %2 {offsets = [0, 0], sizes = [8, 4], strides = [1, 1]} : vector<32x4xf32> to vector<8x4xf32>
    %7 = vector.extract_strided_slice %2 {offsets = [8, 0], sizes = [8, 4], strides = [1, 1]} : vector<32x4xf32> to vector<8x4xf32>
    %8 = arith.addf %6, %7 : vector<8x4xf32>
    %9 = vector.extract_strided_slice %2 {offsets = [16, 0], sizes = [8, 4], strides = [1, 1]} : vector<32x4xf32> to vector<8x4xf32>
    %10 = arith.addf %8, %9 : vector<8x4xf32>
    %11 = vector.extract_strided_slice %2 {offsets = [24, 0], sizes = [8, 4], strides = [1, 1]} : vector<32x4xf32> to vector<8x4xf32>
    %12 = arith.addf %10, %11 : vector<8x4xf32>
    %cst_5 = arith.constant dense<0.000000e+00> : vector<8x1xf32>
    %13 = tpu.matmul %12, %5, %cst_5 {dimension_numbers = #tpu.dot_dimension_numbers<[1], [0], [0], [1], [0, 0, 1, 1], [], []>} : vector<8x4xf32>, vector<4x1xf32>, vector<8x1xf32> -> vector<8x1xf32>
    %cst_6 = arith.constant 9.765625E-4 : f32
    %14 = vector.broadcast %cst_6 : f32 to vector<8x1xf32>
    %15 = arith.mulf %13, %14 : vector<8x1xf32>
    %16 = tpu.concatenate %15, %15, %15, %15 in 0 : vector<8x1xf32>, vector<8x1xf32>, vector<8x1xf32>, vector<8x1xf32> -> vector<32x1xf32>
    %17 = vector.broadcast %16 : vector<32x1xf32> to vector<32x256xf32>
    %18 = arith.subf %3, %17 : vector<32x256xf32>
    %19 = arith.mulf %18, %18 : vector<32x256xf32>
    %cst_7 = arith.constant dense<0.000000e+00> : vector<32xf32>
    %20 = vector.multi_reduction <add>, %19, %cst_7 [1] : vector<32x256xf32> to vector<32xf32>
    %21 = vector.shape_cast %20 : vector<32xf32> to vector<32x1xf32>
    %22 = vector.extract_strided_slice %21 {offsets = [0, 0], sizes = [8, 1], strides = [1, 1]} : vector<32x1xf32> to vector<8x1xf32>
    %23 = vector.extract_strided_slice %21 {offsets = [8, 0], sizes = [8, 1], strides = [1, 1]} : vector<32x1xf32> to vector<8x1xf32>
    %24 = arith.addf %22, %23 : vector<8x1xf32>
    %25 = vector.extract_strided_slice %21 {offsets = [16, 0], sizes = [8, 1], strides = [1, 1]} : vector<32x1xf32> to vector<8x1xf32>
    %26 = arith.addf %24, %25 : vector<8x1xf32>
    %27 = vector.extract_strided_slice %21 {offsets = [24, 0], sizes = [8, 1], strides = [1, 1]} : vector<32x1xf32> to vector<8x1xf32>
    %28 = arith.addf %26, %27 : vector<8x1xf32>
    %cst_8 = arith.constant 9.765625E-4 : f32
    %29 = vector.broadcast %cst_8 : f32 to vector<8x1xf32>
    %30 = arith.mulf %28, %29 : vector<8x1xf32>
    %cst_9 = arith.constant 9.99999974E-6 : f32
    %31 = vector.broadcast %cst_9 : f32 to vector<8x1xf32>
    %32 = arith.addf %30, %31 : vector<8x1xf32>
    %33 = math.rsqrt %32 : vector<8x1xf32>
    %34 = tpu.concatenate %33, %33, %33, %33 in 0 : vector<8x1xf32>, vector<8x1xf32>, vector<8x1xf32>, vector<8x1xf32> -> vector<32x1xf32>
    %35 = vector.broadcast %34 : vector<32x1xf32> to vector<32x256xf32>
    %36 = arith.mulf %18, %35 : vector<32x256xf32>
    %cst_10 = arith.constant 2.000000e-01 : f32
    %37 = vector.broadcast %cst_10 : f32 to vector<32x256xf32>
    %38 = arith.mulf %37, %36 : vector<32x256xf32>
    %39 = arith.maximumf %36, %38 : vector<32x256xf32>
    %c0_11 = arith.constant 0 : index
    %c0_12 = arith.constant 0 : index
    %c0_13 = arith.constant 0 : index
    %40 = vector.load %arg4[%c0_11, %c0_12, %c0_13] : memref<1x32x256xf32, #tpu.memory_space<vmem>>, vector<1x32x256xf32>
    %41 = vector.shape_cast %40 : vector<1x32x256xf32> to vector<32x256xf32>
    %42 = vector.shape_cast %39 : vector<32x256xf32> to vector<1x32x256xf32>
    tpu.vector_store %arg4[%c0_11, %c0_12, %c0_13], %42 {strides = array<i32>} : memref<1x32x256xf32, #tpu.memory_space<vmem>>, vector<1x32x256xf32>,
    return
  }
  func.func @transform_0(%arg0: i32, %arg1: i32) -> (i32, i32, i32) {
    %c0_i32 = arith.constant 0 : i32
    %c0_i32_0 = arith.constant 0 : i32
    %c0_i32_1 = arith.constant 0 : i32
    return %arg0, %c0_i32, %c0_i32_0 : i32, i32, i32
  }
  func.func @transform_1(%arg0: i32, %arg1: i32) -> (i32, i32) {
    %c0_i32 = arith.constant 0 : i32
    %c0_i32_0 = arith.constant 0 : i32
    return %arg1, %c0_i32 : i32, i32
  }
  func.func @transform_2(%arg0: i32, %arg1: i32) -> (i32, i32, i32) {
    %c0_i32 = arith.constant 0 : i32
    %c0_i32_0 = arith.constant 0 : i32
    return %arg0, %arg1, %c0_i32 : i32, i32, i32
  }
}

</mosaic_0001>

<llo_original>
// kernel: tpu_custom_call.1
$region0: #{tpu_custom_call.1}
  #allocation0 [shape = 'u32[]', space=smem, size = 0x4, offset = 0x4, fixed_abs, tag = 'smem constant byte address 0x4 - core index']
  #allocation1 [shape = 'u32[72,128]{1,0:T(1,128)}', space=vmem, size = 0x9000, scoped, tag = 'internal scratch']
  %s0 = inlined_call_operand.vmem [shape: f32[2,4,256], index: 0, kind: input, shape index: {}]
  %s1 = inlined_call_operand.vmem [shape: f32[32,4], index: 1, kind: input, shape index: {}]
  %s2 = inlined_call_operand.hbm [shape: f32[2,32,256], index: 2, kind: output, shape index: {}]
  %s3 = sld [smem:[#allocation0]]
  $region41: #{tpu_custom_call.1} parent=0
    _
  %s5 = ssub.s32 1, %s3
  %s6 = scalar_select 0, %s5, %s3
  $region1: #{tpu_custom_call.1} parent=0
    #allocation2 [shape = 'u8[65536]{0}', space=vmem, size = 0x10000, scoped, tag = 'output window, operand 0']
    #allocation3 [shape = 's32[2]{0}', space=sflag, size = 0x8, scoped, tag = 'scoped memory for tpu_custom_call.1']
    %7 = vsyncpa [#allocation3], 0
    %s8 = scalar_lea.sflag [#allocation3], 1
    %9 = vsyncpa %s8, 0
    loop: start=0, step=1, limit=4
    $region2: #{tpu_custom_call.1} parent=1 // loop_pre_header
      _
    $region3: #{tpu_custom_call.1} parent=1 // loop_header
      %s11 = sphi 0, %s15
      %p12 = scmp.ge.s32.totalorder %s11, 4
      %s18 = sphi 0, %s30
      %s19 = sphi 0, %s26
      %s20 = sphi 0, %s18
      %s21 = sphi 0, %s19
      %s22 = sphi 0, %s20
      %s23 = sphi 0, %s21
      %s33 = sphi 0, %s35
      %s36 = sphi 0, %s33
      %s37 = sphi 0, %s36
      %s53 = sphi 0, %s37
      %s59 = sphi 0, %s61
      %s62 = sphi 0, %s59
      %s63 = sphi 0, %s62
      %s79 = sphi 0, %s63
      %s87 = sphi 0, %s89
      %s90 = sphi 0, %s87
      %s91 = sphi 0, %s90
      %s107 = sphi 0, %s91
    $region4: #{tpu_custom_call.1} parent=1 // loop_header_branch
      %14 = sbr.rel (%p12) target = $region8
    $region5: #{tpu_custom_call.1} parent=1 // loop_body
      %s16 = ssub.s32 %s11, 1
      %s17 = ssub.s32 %s11, 2
      %s24 = sadd.s32 1, %s19
      %p25 = scmp.ge.s32.totalorder %s24, 1
      %s26 = scalar_select %p25, 0, %s24
      %s27 = sadd.s32 1, %s18
      %s28 = scalar_select %p25, %s27, %s18
      %p29 = scmp.ge.s32.totalorder %s28, 2
      %s30 = scalar_select %p29, 0, %s28
      %s31 = ssub.s32 %s18, %s30
      %p32 = scmp.eq.s32.totalorder %s31, 0
      %s34 = sadd.s32 %s33, 1
      %s35 = scalar_select %p32, %s33, %s34
      %p38 = pneg %p32
      %p39 = scmp.eq.s32.totalorder %s11, 1
      %p40 = por %p38, %p39
      %p41 = scmp.ne.s32.totalorder %s33, %s36
      %p42 = scmp.eq.s32.totalorder %s11, 0
      %p43 = por %p41, %p42
      %p44 = scmp.ne.s32.totalorder %s33, %s36
      %p45 = scmp.eq.s32.totalorder %s16, 1
      %p46 = por %p44, %p45
      %p47 = scmp.ne.s32.totalorder %s36, %s37
      %p48 = scmp.eq.s32.totalorder %s16, 0
      %p49 = por %p47, %p48
      %p50 = scmp.ne.s32.totalorder %s36, %s37
      %p51 = scmp.eq.s32.totalorder %s17, 1
      %p52 = por %p50, %p51
      %p54 = scmp.ne.s32.totalorder %s37, %s53
      %p55 = scmp.eq.s32.totalorder %s17, 0
      %p56 = por %p54, %p55
      %s57 = ssub.s32 %s19, %s26
      %p58 = scmp.eq.s32.totalorder %s57, 0
      %s60 = sadd.s32 %s59, 1
      %s61 = scalar_select %p58, %s59, %s60
      %p64 = pneg %p58
      %p65 = scmp.eq.s32.totalorder %s11, 1
      %p66 = por %p64, %p65
      %p67 = scmp.ne.s32.totalorder %s59, %s62
      %p68 = scmp.eq.s32.totalorder %s11, 0
      %p69 = por %p67, %p68
      %p70 = scmp.ne.s32.totalorder %s59, %s62
      %p71 = scmp.eq.s32.totalorder %s16, 1
      %p72 = por %p70, %p71
      %p73 = scmp.ne.s32.totalorder %s62, %s63
      %p74 = scmp.eq.s32.totalorder %s16, 0
      %p75 = por %p73, %p74
      %p76 = scmp.ne.s32.totalorder %s62, %s63
      %p77 = scmp.eq.s32.totalorder %s17, 1
      %p78 = por %p76, %p77
      %p80 = scmp.ne.s32.totalorder %s63, %s79
      %p81 = scmp.eq.s32.totalorder %s17, 0
      %p82 = por %p80, %p81
      %s83 = ssub.s32 %s18, %s30
      %s84 = ssub.s32 %s19, %s26
      %s85 = sor.u32 %s83, %s84
      %p86 = scmp.eq.s32.totalorder %s85, 0
      %s88 = sadd.s32 %s87, 1
      %s89 = scalar_select %p86, %s87, %s88
      %p92 = pneg %p86
      %p93 = scmp.eq.s32.totalorder %s11, 1
      %p94 = por %p92, %p93
      %p95 = scmp.ne.s32.totalorder %s87, %s90
      %p96 = scmp.eq.s32.totalorder %s11, 0
      %p97 = por %p95, %p96
      %p98 = scmp.ne.s32.totalorder %s87, %s90
      %p99 = scmp.eq.s32.totalorder %s16, 1
      %p100 = por %p98, %p99
      %p101 = scmp.ne.s32.totalorder %s90, %s91
      %p102 = scmp.eq.s32.totalorder %s16, 0
      %p103 = por %p101, %p102
      %p104 = scmp.ne.s32.totalorder %s90, %s91
      %p105 = scmp.eq.s32.totalorder %s17, 1
      %p106 = por %p104, %p105
      %p108 = scmp.ne.s32.totalorder %s91, %s107
      %p109 = scmp.eq.s32.totalorder %s17, 0
      %p110 = por %p108, %p109
      %p111 = scmp.le.s32.totalorder 1, %s11
      %p112 = scmp.lt.s32.totalorder %s11, 3
      %p113 = pnand %p111, %p112
      %p114 = pneg %p113
      // Predicated region
      $region9: #{tpu_custom_call.1} parent=5 // pred_check
        _
      $region10: #{tpu_custom_call.1} parent=5 // pred_check_branch
        %116 = sbr.rel (%p113) target = $region12
      $region11: #{tpu_custom_call.1} parent=5 // pred_region
        %s117 = ssub.s32 %s11, 1
        // Predicated region
        $region13: #{tpu_custom_call.1} parent=11 // pred_check
          %p118 = pneg %p75
        $region14: #{tpu_custom_call.1} parent=11 // pred_check_branch
          %120 = sbr.rel (%p118) target = $region16
        $region15: #{tpu_custom_call.1} parent=11 // pred_region
          %s121 = smul.u32 4, %s21
          %p122 = scmp.lt.s32.totalorder %s121, 3
          %s123 = scalar_select %p122, %s121, 3
          %s124 = smul.addr %s123, 8
          %s125 = scalar_lea.vmem %s1, %s124
          %s126 = smul.u32 4, %s21
        $region16: #{tpu_custom_call.1} parent=11 // pred_fallthru
          _
      $region12: #{tpu_custom_call.1} parent=5 // pred_fallthru
        _
      %p127 = scmp.lt.s32.totalorder %s11, 2
      // Predicated region
      $region17: #{tpu_custom_call.1} parent=5 // pred_check
        %p128 = pneg %p127
      $region18: #{tpu_custom_call.1} parent=5 // pred_check_branch
        %130 = sbr.rel (%p128) target = $region20
      $region19: #{tpu_custom_call.1} parent=5 // pred_region
        // Predicated region
        $region21: #{tpu_custom_call.1} parent=19 // pred_check
          %p131 = pneg %p43
        $region22: #{tpu_custom_call.1} parent=19 // pred_check_branch
          %133 = sbr.rel (%p131) target = $region24
        $region23: #{tpu_custom_call.1} parent=19 // pred_region
          %p134 = scmp.lt.s32.totalorder %s18, 1
          %s135 = scalar_select %p134, %s18, 1
          %s136 = smul.addr %s135, 2
          %s137 = smul.addr %s136, 4
          %s138 = scalar_lea.vmem %s0, %s137
        $region24: #{tpu_custom_call.1} parent=19 // pred_fallthru
          _
      $region20: #{tpu_custom_call.1} parent=5 // pred_fallthru
        _
      %p139 = scmp.le.s32.totalorder 1, %s11
      %p140 = scmp.lt.s32.totalorder %s11, 3
      %p141 = pnand %p139, %p140
      %p142 = pneg %p141
      // Predicated region
      $region25: #{tpu_custom_call.1} parent=5 // pred_check
        _
      $region26: #{tpu_custom_call.1} parent=5 // pred_check_branch
        %144 = sbr.rel (%p141) target = $region28
      $region27: #{tpu_custom_call.1} parent=5 // pred_region
        %s145 = ssub.s32 %s11, 1
        %p146 = scmp.lt.s32.totalorder %s20, 1
        %s147 = scalar_select %p146, %s20, 1
        %s148 = smul.addr %s147, 2
        %s149 = smul.addr %s148, 4
        %s150 = scalar_lea.vmem %s0, %s149
        %p151 = pneg %p49
        %p152 = pneg %p46
        %s153 = smul.u32 4, %s21
        %p154 = scmp.lt.s32.totalorder %s153, 3
        %s155 = scalar_select %p154, %s153, 3
        %s156 = smul.addr %s155, 8
        %s157 = scalar_lea.vmem %s1, %s156
        %p158 = pneg %p75
        %p159 = pneg %p72
        %p160 = pneg %p103
        %p161 = pneg %p100
        %s162 = sand.u32 %s90, 1
        %s163 = scalar_lea.sflag [#allocation3], %s162
        %s164 = sand.u32 %s90, 1
        %s165 = smul.addr %s164, 64
        %s166 = scalar_lea.vmem [#allocation2], %s165
        %p167 = scmp.lt.s32.totalorder %s20, 1
        %s168 = scalar_select %p167, %s20, 1
        %s169 = smul.addr %s168, 2
        %s170 = smul.addr %s169, 4
        %s171 = scalar_lea.vmem %s0, %s170
        %s172 = smul.u32 4, %s21
        %p173 = scmp.lt.s32.totalorder %s172, 3
        %s174 = scalar_select %p173, %s172, 3
        %s175 = smul.addr %s174, 8
        %s176 = scalar_lea.vmem %s1, %s175
        %s177 = smul.u32 4, %s21
        %s178 = smul.u32 4, %s21
        %v179 = vld [vmem:[%s171] sm:$0xff]
        %v180 = vld [vmem:[%s176] sm:$0xff]
        %v181 = vld [vmem:[%s176 + $0x8] sm:$0xff]
        %v182 = vld [vmem:[%s176 + $0x10] sm:$0xff]
        %v183 = vld [vmem:[%s176 + $0x18] sm:$0xff]
        %185 = vst [vmem:[#allocation1] ss:$2 sm:$0xff] %v179
        %v186 = vld.sshfl [vmem:[#allocation1] sm:$0xff pattern:$0x75316420]
        %v187 = vld.sshfl [vmem:[#allocation1 + $0x8] sm:$0xff pattern:$0x75316420]
        %vm188 = vcmask 31744
        %v190 = vsel %vm188, %v180, 0
        %v193 = vsel %vm188, %v181, 0
        %v196 = vsel %vm188, %v182, 0
        %v199 = vsel %vm188, %v183, 0
        %vm201 = vcmask 1043456
        %v202 = vsel %vm201, %v186, 0
        %v204 = vsel %vm201, %v187, 0
        %206 = vmatpush.msra.mxu0 0.0
        %207 = vmatpush.msra.mxu0 0.0
        %208 = vmatpush.msra.mxu0 0.0
        %209 = vmatpush.msra.mxu0 0.0
        %210 = vmatpush.msra.mxu0 0.0
        %211 = vmatpush.msra.mxu0 0.0
        %212 = vmatpush.msra.mxu0 0.0
        %213 = vmatpush.msra.mxu0 0.0
        %214 = vmatpush.msra.mxu0 0.0
        %215 = vmatpush.msra.mxu0 0.0
        %216 = vmatpush.msra.mxu0 0.0
        %217 = vmatpush.msra.mxu0 0.0
        %218 = vmatpush.msra.mxu0 0.0
        %219 = vmatpush.msra.mxu0 0.0
        %220 = vmatpush.msra.mxu0 0.0
        %221 = vmatpush.msra.mxu0 %v202
        %222 = vmatmul.f32.gmra.mxu0 %v190
        %v223 = vpop.f32.mrf.mxu0
        %v224 = vadd.f32 0.0, %v223
        %225 = vmatmul.f32.gmra.mxu0 %v193
        %v226 = vpop.f32.mrf.mxu0
        %v227 = vadd.f32 0.0, %v226
        %228 = vmatmul.f32.gmra.mxu0 %v196
        %v229 = vpop.f32.mrf.mxu0
        %v230 = vadd.f32 0.0, %v229
        %231 = vmatmul.f32.gmra.mxu0 %v199
        %v232 = vpop.f32.mrf.mxu0
        %v233 = vadd.f32 0.0, %v232
        %234 = vdwg.mxu0
        %235 = vmatpush.msra.mxu0 0.0
        %236 = vmatpush.msra.mxu0 0.0
        %237 = vmatpush.msra.mxu0 0.0
        %238 = vmatpush.msra.mxu0 0.0
        %239 = vmatpush.msra.mxu0 0.0
        %240 = vmatpush.msra.mxu0 0.0
        %241 = vmatpush.msra.mxu0 0.0
        %242 = vmatpush.msra.mxu0 0.0
        %243 = vmatpush.msra.mxu0 0.0
        %244 = vmatpush.msra.mxu0 0.0
        %245 = vmatpush.msra.mxu0 0.0
        %246 = vmatpush.msra.mxu0 0.0
        %247 = vmatpush.msra.mxu0 0.0
        %248 = vmatpush.msra.mxu0 0.0
        %249 = vmatpush.msra.mxu0 0.0
        %250 = vmatpush.msra.mxu0 %v204
        %251 = vmatmul.f32.gmra.mxu0 %v190
        %v252 = vpop.f32.mrf.mxu0
        %v253 = vadd.f32 0.0, %v252
        %254 = vmatmul.f32.gmra.mxu0 %v193
        %v255 = vpop.f32.mrf.mxu0
        %v256 = vadd.f32 0.0, %v255
        %257 = vmatmul.f32.gmra.mxu0 %v196
        %v258 = vpop.f32.mrf.mxu0
        %v259 = vadd.f32 0.0, %v258
        %260 = vmatmul.f32.gmra.mxu0 %v199
        %v261 = vpop.f32.mrf.mxu0
        %v262 = vadd.f32 0.0, %v261
        %263 = vdwg.mxu0
        %264 = vst [vmem:[#allocation1] ss:$2 sm:$0xff] %v179
        %v265 = vld.sshfl [vmem:[#allocation1] sm:$0xff pattern:$0x75316420]
        %v266 = vld.sshfl [vmem:[#allocation1 + $0x8] sm:$0xff pattern:$0x75316420]
        %v269 = vsel %vm201, %v265, 0.0
        %v270 = vsel %vm201, %v266, 0.0
        %v271 = vadd.f32 %v269, %v270
        %272 = vadd.xlane.f32.xlu0 %v271
        %v273 = vpop.xlane.xlu0 %272
        %v274 = vadd.f32 %v180, %v181
        %v275 = vadd.f32 %v274, %v182
        %v276 = vadd.f32 %v275, %v183
        %v278 = vsel %vm188, %v276, 0
        %v281 = vsel %vm201, %v273, 0
        %283 = vmatpush.msra.mxu0 0.0
        %284 = vmatpush.msra.mxu0 0.0
        %285 = vmatpush.msra.mxu0 0.0
        %286 = vmatpush.msra.mxu0 0.0
        %287 = vmatpush.msra.mxu0 0.0
        %288 = vmatpush.msra.mxu0 0.0
        %289 = vmatpush.msra.mxu0 0.0
        %290 = vmatpush.msra.mxu0 0.0
        %291 = vmatpush.msra.mxu0 0.0
        %292 = vmatpush.msra.mxu0 0.0
        %293 = vmatpush.msra.mxu0 0.0
        %294 = vmatpush.msra.mxu0 0.0
        %295 = vmatpush.msra.mxu0 0.0
        %296 = vmatpush.msra.mxu0 0.0
        %297 = vmatpush.msra.mxu0 0.0
        %298 = vmatpush.msra.mxu0 %v281
        %299 = vmatmul.f32.gmra.mxu0 %v278
        %v300 = vpop.f32.mrf.mxu0
        %v301 = vadd.f32 0.0, %v300
        %302 = vdwg.mxu0
        %v303 = vmul.f32 %v301, 0.0009765625
        %305 = vset.pattern.permute.xlu0 0
        %306 = vperm.xlu0 %305, %v303
        %v307 = vpop.permute.xlu0 %306
        %v309 = vsub.f32 %v224, %v307
        %v310 = vsub.f32 %v253, %v307
        %v311 = vsub.f32 %v227, %v307
        %v312 = vsub.f32 %v256, %v307
        %v313 = vsub.f32 %v230, %v307
        %v314 = vsub.f32 %v259, %v307
        %v315 = vsub.f32 %v233, %v307
        %v316 = vsub.f32 %v262, %v307
        %v317 = vmul.f32 %v309, %v309
        %v318 = vmul.f32 %v310, %v310
        %v319 = vmul.f32 %v311, %v311
        %v320 = vmul.f32 %v312, %v312
        %v321 = vmul.f32 %v313, %v313
        %v322 = vmul.f32 %v314, %v314
        %v323 = vmul.f32 %v315, %v315
        %v324 = vmul.f32 %v316, %v316
        %v325 = vadd.f32 %v317, %v318
        %326 = vadd.xlane.f32.xlu0 %v325
        %v327 = vpop.xlane.xlu0 %326
        %v328 = vadd.f32 %v319, %v320
        %329 = vadd.xlane.f32.xlu0 %v328
        %v330 = vpop.xlane.xlu0 %329
        %v331 = vadd.f32 %v321, %v322
        %332 = vadd.xlane.f32.xlu0 %v331
        %v333 = vpop.xlane.xlu0 %332
        %v334 = vadd.f32 %v323, %v324
        %335 = vadd.xlane.f32.xlu0 %v334
        %v336 = vpop.xlane.xlu0 %335
        %v337 = vadd.f32 %v327, %v330
        %v338 = vadd.f32 %v337, %v333
        %v339 = vadd.f32 %v338, %v336
        %v340 = vmul.f32 %v339, 0.0009765625
        %v341 = vadd.f32 %v340, 1e-05
        %v342 = vrsqrt.pop %v341
        %v343 = vmul.f32 %v342, %v341
        %v344 = vmul.f32 %v343, %v342
        %v345 = vmul.f32 0.5, %v344
        %v346 = vsub.f32 1.5, %v345
        %v347 = vmul.f32 %v342, %v346
        %vm348 = vweird.f32 %v341
        %vm349 = vweird.f32 %v342
        %vm350 = vmor %vm348, %vm349
        %v351 = vsel %vm350, %v342, %v347
        %353 = vset.pattern.permute.xlu0 0
        %354 = vperm.xlu0 %353, %v351
        %v355 = vpop.permute.xlu0 %354
        %v357 = vmul.f32 %v309, %v355
        %v358 = vmul.f32 %v310, %v355
        %v359 = vmul.f32 %v311, %v355
        %v360 = vmul.f32 %v312, %v355
        %v361 = vmul.f32 %v313, %v355
        %v362 = vmul.f32 %v314, %v355
        %v363 = vmul.f32 %v315, %v355
        %v364 = vmul.f32 %v316, %v355
        %v365 = vmul.f32 %v357, 0.2
        %v366 = vmul.f32 %v358, 0.2
        %v367 = vmul.f32 %v359, 0.2
        %v368 = vmul.f32 %v360, 0.2
        %v369 = vmul.f32 %v361, 0.2
        %v370 = vmul.f32 %v362, 0.2
        %v371 = vmul.f32 %v363, 0.2
        %v372 = vmul.f32 %v364, 0.2
        %v373 = vmax.f32 %v357, %v365
        %v374 = vmax.f32 %v358, %v366
        %v375 = vmax.f32 %v359, %v367
        %v376 = vmax.f32 %v360, %v368
        %v377 = vmax.f32 %v361, %v369
        %v378 = vmax.f32 %v362, %v370
        %v379 = vmax.f32 %v363, %v371
        %v380 = vmax.f32 %v364, %v372
        %381 = vst [vmem:[%s166] sm:$0xff] %v373
        %382 = vst [vmem:[%s166 + $0x8] sm:$0xff] %v374
        %383 = vst [vmem:[%s166 + $0x10] sm:$0xff] %v375
        %384 = vst [vmem:[%s166 + $0x18] sm:$0xff] %v376
        %385 = vst [vmem:[%s166 + $0x20] sm:$0xff] %v377
        %386 = vst [vmem:[%s166 + $0x28] sm:$0xff] %v378
        %387 = vst [vmem:[%s166 + $0x30] sm:$0xff] %v379
        %388 = vst [vmem:[%s166 + $0x38] sm:$0xff] %v380
        %s389 = sand.u32 %s90, 1
        %s390 = scalar_lea.sflag [#allocation3], %s389
        %s391 = sand.u32 %s90, 1
        %s392 = smul.addr %s391, 64
        %s393 = scalar_lea.vmem [#allocation2], %s392
        // Predicated region
        $region29: #{tpu_custom_call.1} parent=27 // pred_check
          %p394 = pneg %p100
        $region30: #{tpu_custom_call.1} parent=27 // pred_check_branch
          %396 = sbr.rel (%p394) target = $region32
        $region31: #{tpu_custom_call.1} parent=27 // pred_region
          %s397 = smul.u32 4, %s21
          %399 = vsyncadd %s390, 0
          %s400 = smul.addr %s397, 2
          %s401 = smul.addr %s20, 8
          %s402 = sadd.s32 %s400, %s401
          %s403 = smul.addr %s402, 8
          %s404 = scalar_lea.hbm %s2, %s403
          %s405 = sshll.u32 %s393, 4
          %s406 = int_to_ptr.vmem [resolvable:$true] %s405
          %s407 = sshll.u32 %s404, 4
          %s408 = int_to_ptr.hbm [resolvable:$true] %s407
          %413 = dma.vmem_to_hbm [thread:$0]  %s406, 1024, %s408, %s390, 256, 256, 16
        $region32: #{tpu_custom_call.1} parent=27 // pred_fallthru
          _
      $region28: #{tpu_custom_call.1} parent=5 // pred_fallthru
        _
      %p414 = scmp.le.s32.totalorder 2, %s11
      // Predicated region
      $region33: #{tpu_custom_call.1} parent=5 // pred_check
        %p415 = pneg %p414
      $region34: #{tpu_custom_call.1} parent=5 // pred_check_branch
        %417 = sbr.rel (%p415) target = $region36
      $region35: #{tpu_custom_call.1} parent=5 // pred_region
        %s418 = ssub.s32 %s11, 2
        // Predicated region
        $region37: #{tpu_custom_call.1} parent=35 // pred_check
          %p419 = pneg %p106
        $region38: #{tpu_custom_call.1} parent=35 // pred_check_branch
          %421 = sbr.rel (%p419) target = $region40
        $region39: #{tpu_custom_call.1} parent=35 // pred_region
          %s422 = sand.u32 %s91, 1
          %s423 = scalar_lea.sflag [#allocation3], %s422
          %s424 = sand.u32 %s91, 1
          %s425 = smul.addr %s424, 64
          %s426 = scalar_lea.vmem [#allocation2], %s425
          %428 = dma.done %s423, 1024
        $region40: #{tpu_custom_call.1} parent=35 // pred_fallthru
          _
      $region36: #{tpu_custom_call.1} parent=5 // pred_fallthru
        _
    $region6: #{tpu_custom_call.1} parent=1 // loop_footer
      %s15 = sadd.s32 1, %s11
    $region7: #{tpu_custom_call.1} parent=1 // loop_footer_branch
      %10 = sbr.rel target = $region3
    $region8: #{tpu_custom_call.1} parent=1 // loop_exit
      _
    %429 = vsyncpa [#allocation3], 1
    %s430 = scalar_lea.sflag [#allocation3], 1
    %431 = vsyncpa %s430, 1

</llo_original>
